<compile_context>
chip_gen: v6e
topology: v6e:2x2x1
jax: 0.10.0
libtpu: 0.0.40
codegen_flags: <defaults>
</compile_context>

<pallas_src>
import functools
import math

import jax
import jax.numpy as jnp
from jax import lax
from jax.experimental import pallas as pl
from jax.experimental.pallas import tpu as pltpu


# ---------------------------------------------------------------------------
# Kernel
# ---------------------------------------------------------------------------
def _focal_loss_kernel(logits_ref, tgt_ref, out_ref, *,
                       alpha, gamma, n_classes, rows_total, tile_rows,
                       tiles_per_core, chunk, need_mask):
    c_id = pl.program_id(0)   # core split ("parallel"; real split only on v7x)
    b_id = pl.program_id(1)   # batch
    i_id = pl.program_id(2)   # row-tile within this core's range

    # Per-core resident partial-sum block: zero it on this core's first step.
    @pl.when((b_id == 0) & (i_id == 0))
    def _():
        out_ref[...] = jnp.zeros_like(out_ref)

    g = float(gamma)
    g_int = int(round(g)) if (g == round(g) and g >= 0) else None

    if need_mask:
        # Global row offset from the UNclamped tile index: duplicated clamped
        # tiles and ragged tails land at rows >= rows_total and are zeroed.
        row0 = (c_id * tiles_per_core + i_id) * tile_rows
        base_rows = lax.broadcasted_iota(jnp.int32, (chunk, 128), 0)  # hoisted

    n_chunks = tile_rows // chunk
    acc = jnp.zeros((chunk, 128), jnp.float32)

    for ci in range(n_chunks):                  # static -> fully unrolled
        r0 = ci * chunk
        tgt = tgt_ref[r0:r0 + chunk, :]         # native label dtype

        # Load + up-convert each class slab exactly once; slabs stay
        # vreg-resident across the max pass and the exp/select pass.
        xs = [logits_ref[c, r0:r0 + chunk, :].astype(jnp.float32)
              for c in range(n_classes)]

        m = xs[0]
        for c in range(1, n_classes):
            m = jnp.maximum(m, xs[c])

        # class 0 outside the loop: avoids three zeros-init broadcasts.
        z0 = xs[0] - m
        s = jnp.exp(z0)                         # sum of exp(z - m)
        hit0 = tgt == 0
        z_y = jnp.where(hit0, z0, 0.0)          # shifted target logit
        w_y = jnp.where(hit0, jnp.float32(alpha[0]), 0.0)   # alpha[target]
        for c in range(1, n_classes):
            zc = xs[c] - m
            s = s + jnp.exp(zc)
            hit = tgt == c
            z_y = jnp.where(hit, zc, z_y)
            w_y = jnp.where(hit, jnp.float32(alpha[c]), w_y)

        # t = alpha[y] * log_softmax(x)[y]  ->  ce = -t,  pt = exp(-ce) = exp(t)
        t = w_y * (z_y - jnp.log(s))

        if need_mask:
            rows = base_rows + (row0 + r0)
            t = jnp.where(rows < rows_total, t, 0.0)   # also kills garbage/NaN

        q = 1.0 - jnp.exp(t)                    # q = 1 - pt
        if g_int is not None:
            mod = lax.integer_pow(q, g_int)     # gamma=2: pure VPU muls
        else:
            mod = q ** jnp.float32(g)           # EUP fallback
        acc = acc - mod * t                     # focal = mod * ce = -(mod * t)

    # Fold the (chunk, 128) accumulator into the (8, 128) resident block.
    if chunk % 8 == 0:
        out_ref[...] += acc.reshape(chunk // 8, 8, 128).sum(axis=0)
    else:  # rare irregular tile: cross-sublane reduce once per step
        out_ref[0:1, :] += acc.sum(axis=0, keepdims=True)


# ---------------------------------------------------------------------------
# Wrapper helpers
# ---------------------------------------------------------------------------
def _default_n_cores():
    """2-way core split only on 2-TensorCore chips (v7x); 1 elsewhere."""
    try:
        kind = jax.devices()[0].device_kind.lower()
    except Exception:
        return 1
    return 2 if ("v7" in kind or "7x" in kind) else 1


def _pick_tile_rows(R, budget, n_cores):
    """Largest TR <= budget that (a) divides R (no ragged tile) and
    (b) makes the tile count a multiple of n_cores (no duplicated tile).
    Returns (TR, need_mask)."""
    budget = max(1, min(budget, R))
    best_div = None
    d = budget
    while d >= 1:
        if R % d == 0 and (d % 8 == 0 or d == R):
            if best_div is None:
                best_div = d
            if (R // d) % n_cores == 0:
                return d, False               # clean: no in-kernel mask needed
        d -= 1
    if best_div is not None:
        return best_div, True                 # duplicated clamped tile -> mask
    # R has no 8-aligned divisor <= budget: ragged last tile, masked in-kernel.
    return max(8, (budget // 8) * 8), True


def _pick_chunk(tr, n_classes):
    """Row-chunk size: keep the per-chunk vreg working set well under 64."""
    for cand in (32, 16, 8):
        if tr % cand == 0 and (cand // 8) * (n_classes + 7) <= 48:
            return cand
    return tr  # tiny / irregular tile: single chunk


# ---------------------------------------------------------------------------
# Public entry point
# ---------------------------------------------------------------------------
def focal_loss(preds, targets, alpha, gamma=2.0, tile_rows=1024, n_cores=None):
    """preds: (B, C, D, H, W) logits (any float dtype, bf16 kept as-is);
    targets: (B, D, H, W) integer labels."""
    B, C = preds.shape[0], preds.shape[1]
    assert len(alpha) == C, "alpha must have one weight per class"
    S = math.prod(preds.shape[2:])
    n = B * S                                   # true pixel count

    if S % 128 == 0:
        # Free reshape: W is the contiguous minor axis -> no data movement.
        logits = preds.reshape(B, C, S // 128, 128)
        tgt = targets.reshape(B, S // 128, 128)
    else:
        # Rare fallback: pad flattened pixels to a multiple of 128.  Padded
        # pixels get an out-of-range label -> zero weight -> zero loss.
        s_pad = pl.cdiv(S, 128) * 128
        logits = jnp.pad(preds.reshape(B, C, S),
                         ((0, 0), (0, 0), (0, s_pad - S)))
        logits = logits.reshape(B, C, s_pad // 128, 128)
        tgt = jnp.pad(targets.reshape(B, S).astype(jnp.int32),
                      ((0, 0), (0, s_pad - S)), constant_values=-1)
        tgt = tgt.reshape(B, s_pad // 128, 128)

    R = logits.shape[2]                         # pixel rows of width 128

    if n_cores is None:
        n_cores = _default_n_cores()
    n_cores = max(1, min(int(n_cores), R))

    # VMEM budget for double-buffered input tiles: stays under the default
    # scoped-VMEM limit on every generation (v5e 16 MiB ... v7x 32 MiB).
    bytes_per_row = 2 * 128 * (C * logits.dtype.itemsize + 4)
    vmem_rows = max(8, (12 << 20) // bytes_per_row)
    budget = max(1, min(int(tile_rows), vmem_rows))

    TR, need_mask = _pick_tile_rows(R, budget, n_cores)
    num_r_tiles = pl.cdiv(R, TR)
    tiles_per_core = pl.cdiv(num_r_tiles, n_cores)
    chunk = _pick_chunk(TR, C)
    assert TR % chunk == 0

    # Keep labels in their native dtype when the kernel can load it directly
    # (avoids a full HBM read+write cast pass in XLA).
    tname = str(tgt.dtype)
    if tname in ("int32", "uint32"):
        pass
    elif tname in ("int8", "uint8") and chunk % 32 == 0:
        pass                                    # int8 (32,128) tiling respected
    else:
        tgt = tgt.astype(jnp.int32)

    alpha_t = tuple(float(a) for a in alpha)

    def r_block(c, i):
        # Clamp so an overshooting core never requests an OOB block (its
        # contribution is masked to zero in-kernel when need_mask is set).
        return jnp.minimum(c * tiles_per_core + i, num_r_tiles - 1)

    kernel = functools.partial(
        _focal_loss_kernel,
        alpha=alpha_t, gamma=float(gamma), n_classes=C,
        rows_total=R, tile_rows=TR, tiles_per_core=tiles_per_core,
        chunk=chunk, need_mask=need_mask)

    partial_sums = pl.pallas_call(
        kernel,
        out_shape=jax.ShapeDtypeStruct((n_cores, 8, 128), jnp.float32),
        grid_spec=pltpu.PrefetchScalarGridSpec(
            num_scalar_prefetch=0,
            grid=(n_cores, B, tiles_per_core),
            in_specs=[
                # logits tile: (C, TR, 128), class axis major
                pl.BlockSpec((None, C, TR, 128),
                             lambda c, b, i: (b, 0, r_block(c, i), 0)),
                # targets tile: (TR, 128), native label dtype
                pl.BlockSpec((None, TR, 128),
                             lambda c, b, i: (b, r_block(c, i), 0)),
            ],
            # per-core resident (8,128) partial-sum accumulator
            out_specs=pl.BlockSpec((None, 8, 128), lambda c, b, i: (c, 0, 0)),
        ),
        compiler_params=pltpu.CompilerParams(
            dimension_semantics=("parallel", "arbitrary", "arbitrary"),
        ),
    )(logits, tgt)

    # Final tiny reduction + mean over the TRUE pixel count.
    return jnp.sum(partial_sums) / jnp.float32(n)


# ---------------------------------------------------------------------------
# Plain-JAX reference (mirrors the PyTorch module)
# ---------------------------------------------------------------------------
def _focal_loss_ref(preds, targets, alpha, gamma=2.0):
    C = preds.shape[1]
    logits = jnp.moveaxis(preds, 1, -1).reshape(-1, C).astype(jnp.float32)
    tgt = targets.reshape(-1).astype(jnp.int32)
    logp = jax.nn.log_softmax(logits, axis=-1)
    logp_y = jnp.take_along_axis(logp, tgt[:, None], axis=-1)[:, 0]
    w_y = jnp.asarray(alpha, jnp.float32)[tgt]
    ce = -w_y * logp_y
    pt = jnp.exp(-ce)
    return jnp.mean((1.0 - pt) ** gamma * ce)


if __name__ == "__main__":
    key = jax.random.PRNGKey(0)
    k_preds, k_tgt = jax.random.split(key)

    B, C, D, H, W = 2, 4, 16, 16, 16
    preds = jax.random.normal(k_preds, (B, C, D, H, W), dtype=jnp.float32)
    targets = jax.random.randint(k_tgt, (B, D, H, W), 0, C, dtype=jnp.int32)

    gamma = 2.0
    alpha = [0.01, 4.0, 1.8, 6.0]  # [background, necrotic, edema, enhancing]

    loss = focal_loss(preds, targets, alpha, gamma=gamma)
    loss = jax.block_until_ready(loss)

    ref = _focal_loss_ref(preds, targets, alpha, gamma=gamma)
    assert jnp.allclose(loss, ref, rtol=1e-4, atol=1e-5), (loss, ref)

    print("KERNEL_OK")
</pallas_src>

<mosaic_0001>
module attributes {stable_mosaic.version = 11 : i64} {
  func.func @_focal_loss_kernel(%arg0: i32, %arg1: i32, %arg2: i32, %arg3: memref<1x4x32x128xf32, #tpu.memory_space<vmem>>, %arg4: memref<1x32x128xi32, #tpu.memory_space<vmem>>, %arg5: memref<1x8x128xf32, #tpu.memory_space<vmem>>) attributes {dimension_semantics = [#tpu.dimension_semantics<parallel>, #tpu.dimension_semantics<arbitrary>, #tpu.dimension_semantics<arbitrary>], iteration_bounds = array<i64: 1, 2, 1>, scalar_prefetch = 0 : i64, scratch_operands = 0 : i64, tpu.core_type = #tpu.core_type<tc>, window_params = [{transform_indices = @transform_0, window_bounds = array<i64: 1, 4, 32, 128>}, {transform_indices = @transform_1, window_bounds = array<i64: 1, 32, 128>}, {transform_indices = @transform_2, window_bounds = array<i64: 1, 8, 128>}]} {
    %c0_i32 = arith.constant 0 : i32
    %0 = arith.cmpi eq, %arg1, %c0_i32 : i32
    %c0_i32_0 = arith.constant 0 : i32
    %1 = arith.cmpi eq, %arg2, %c0_i32_0 : i32
    %2 = arith.andi %0, %1 : i1
    %3 = arith.extui %2 : i1 to i32
    %c0_i32_1 = arith.constant 0 : i32
    %4 = arith.cmpi ne, %3, %c0_i32_1 : i32
    scf.if %4 {
      %cst_32 = arith.constant 0.000000e+00 : f32
      %69 = vector.broadcast %cst_32 : f32 to vector<8x128xf32>
      %c0_33 = arith.constant 0 : index
      %c0_34 = arith.constant 0 : index
      %c0_35 = arith.constant 0 : index
      %70 = vector.load %arg5[%c0_33, %c0_34, %c0_35] : memref<1x8x128xf32, #tpu.memory_space<vmem>>, vector<1x8x128xf32>
      %71 = vector.shape_cast %70 : vector<1x8x128xf32> to vector<8x128xf32>
      %72 = vector.shape_cast %69 : vector<8x128xf32> to vector<1x8x128xf32>
      tpu.vector_store %arg5[%c0_33, %c0_34, %c0_35], %72 {strides = array<i32>} : memref<1x8x128xf32, #tpu.memory_space<vmem>>, vector<1x8x128xf32>,
    } else {
    }
    %cst = arith.constant 0.000000e+00 : f32
    %5 = vector.broadcast %cst : f32 to vector<32x128xf32>
    %c0 = arith.constant 0 : index
    %c0_2 = arith.constant 0 : index
    %c0_3 = arith.constant 0 : index
    %6 = vector.load %arg4[%c0, %c0_2, %c0_3] : memref<1x32x128xi32, #tpu.memory_space<vmem>>, vector<1x32x128xi32>
    %7 = vector.shape_cast %6 : vector<1x32x128xi32> to vector<32x128xi32>
    %c0_4 = arith.constant 0 : index
    %c0_5 = arith.constant 0 : index
    %c0_6 = arith.constant 0 : index
    %c0_7 = arith.constant 0 : index
    %8 = vector.load %arg3[%c0_4, %c0_5, %c0_6, %c0_7] : memref<1x4x32x128xf32, #tpu.memory_space<vmem>>, vector<1x1x32x128xf32>
    %9 = vector.shape_cast %8 : vector<1x1x32x128xf32> to vector<32x128xf32>
    %c0_8 = arith.constant 0 : index
    %c1 = arith.constant 1 : index
    %c0_9 = arith.constant 0 : index
    %c0_10 = arith.constant 0 : index
    %10 = vector.load %arg3[%c0_8, %c1, %c0_9, %c0_10] : memref<1x4x32x128xf32, #tpu.memory_space<vmem>>, vector<1x1x32x128xf32>
    %11 = vector.shape_cast %10 : vector<1x1x32x128xf32> to vector<32x128xf32>
    %c0_11 = arith.constant 0 : index
    %c2 = arith.constant 2 : index
    %c0_12 = arith.constant 0 : index
    %c0_13 = arith.constant 0 : index
    %12 = vector.load %arg3[%c0_11, %c2, %c0_12, %c0_13] : memref<1x4x32x128xf32, #tpu.memory_space<vmem>>, vector<1x1x32x128xf32>
    %13 = vector.shape_cast %12 : vector<1x1x32x128xf32> to vector<32x128xf32>
    %c0_14 = arith.constant 0 : index
    %c3 = arith.constant 3 : index
    %c0_15 = arith.constant 0 : index
    %c0_16 = arith.constant 0 : index
    %14 = vector.load %arg3[%c0_14, %c3, %c0_15, %c0_16] : memref<1x4x32x128xf32, #tpu.memory_space<vmem>>, vector<1x1x32x128xf32>
    %15 = vector.shape_cast %14 : vector<1x1x32x128xf32> to vector<32x128xf32>
    %16 = arith.maximumf %9, %11 : vector<32x128xf32>
    %17 = arith.maximumf %16, %13 : vector<32x128xf32>
    %18 = arith.maximumf %17, %15 : vector<32x128xf32>
    %19 = arith.subf %9, %18 : vector<32x128xf32>
    %20 = math.exp %19 : vector<32x128xf32>
    %c0_i32_17 = arith.constant 0 : i32
    %21 = vector.broadcast %c0_i32_17 : i32 to vector<32x128xi32>
    %22 = arith.cmpi eq, %7, %21 : vector<32x128xi32>
    %cst_18 = arith.constant 0.000000e+00 : f32
    %23 = vector.broadcast %cst_18 : f32 to vector<32x128xf32>
    %24 = arith.select %22, %19, %23 : vector<32x128xi1>, vector<32x128xf32>
    %cst_19 = arith.constant 0.00999999977 : f32
    %cst_20 = arith.constant 0.000000e+00 : f32
    %25 = vector.broadcast %cst_19 : f32 to vector<32x128xf32>
    %26 = vector.broadcast %cst_20 : f32 to vector<32x128xf32>
    %27 = arith.select %22, %25, %26 : vector<32x128xi1>, vector<32x128xf32>
    %28 = arith.subf %11, %18 : vector<32x128xf32>
    %29 = math.exp %28 : vector<32x128xf32>
    %30 = arith.addf %20, %29 : vector<32x128xf32>
    %c1_i32 = arith.constant 1 : i32
    %31 = vector.broadcast %c1_i32 : i32 to vector<32x128xi32>
    %32 = arith.cmpi eq, %7, %31 : vector<32x128xi32>
    %33 = arith.select %32, %28, %24 : vector<32x128xi1>, vector<32x128xf32>
    %cst_21 = arith.constant 4.000000e+00 : f32
    %34 = vector.broadcast %cst_21 : f32 to vector<32x128xf32>
    %35 = arith.select %32, %34, %27 : vector<32x128xi1>, vector<32x128xf32>
    %36 = arith.subf %13, %18 : vector<32x128xf32>
    %37 = math.exp %36 : vector<32x128xf32>
    %38 = arith.addf %30, %37 : vector<32x128xf32>
    %c2_i32 = arith.constant 2 : i32
    %39 = vector.broadcast %c2_i32 : i32 to vector<32x128xi32>
    %40 = arith.cmpi eq, %7, %39 : vector<32x128xi32>
    %41 = arith.select %40, %36, %33 : vector<32x128xi1>, vector<32x128xf32>
    %cst_22 = arith.constant 1.800000e+00 : f32
    %42 = vector.broadcast %cst_22 : f32 to vector<32x128xf32>
    %43 = arith.select %40, %42, %35 : vector<32x128xi1>, vector<32x128xf32>
    %44 = arith.subf %15, %18 : vector<32x128xf32>
    %45 = math.exp %44 : vector<32x128xf32>
    %46 = arith.addf %38, %45 : vector<32x128xf32>
    %c3_i32 = arith.constant 3 : i32
    %47 = vector.broadcast %c3_i32 : i32 to vector<32x128xi32>
    %48 = arith.cmpi eq, %7, %47 : vector<32x128xi32>
    %49 = arith.select %48, %44, %41 : vector<32x128xi1>, vector<32x128xf32>
    %cst_23 = arith.constant 6.000000e+00 : f32
    %50 = vector.broadcast %cst_23 : f32 to vector<32x128xf32>
    %51 = arith.select %48, %50, %43 : vector<32x128xi1>, vector<32x128xf32>
    %52 = math.log %46 : vector<32x128xf32>
    %53 = arith.subf %49, %52 : vector<32x128xf32>
    %54 = arith.mulf %51, %53 : vector<32x128xf32>
    %55 = math.exp %54 : vector<32x128xf32>
    %cst_24 = arith.constant 1.000000e+00 : f32
    %56 = vector.broadcast %cst_24 : f32 to vector<32x128xf32>
    %57 = arith.subf %56, %55 : vector<32x128xf32>
    %58 = arith.mulf %57, %57 : vector<32x128xf32>
    %59 = arith.mulf %58, %54 : vector<32x128xf32>
    %60 = arith.subf %5, %59 : vector<32x128xf32>
    %c0_25 = arith.constant 0 : index
    %c0_26 = arith.constant 0 : index
    %c0_27 = arith.constant 0 : index
    %61 = vector.load %arg5[%c0_25, %c0_26, %c0_27] : memref<1x8x128xf32, #tpu.memory_space<vmem>>, vector<1x8x128xf32>
    %62 = vector.shape_cast %61 : vector<1x8x128xf32> to vector<8x128xf32>
    %63 = vector.shape_cast %60 : vector<32x128xf32> to vector<4x8x128xf32>
    %cst_28 = arith.constant dense<0.000000e+00> : vector<8x128xf32>
    %64 = vector.multi_reduction <add>, %63, %cst_28 [0] : vector<4x8x128xf32> to vector<8x128xf32>
    %65 = arith.addf %62, %64 : vector<8x128xf32>
    %c0_29 = arith.constant 0 : index
    %c0_30 = arith.constant 0 : index
    %c0_31 = arith.constant 0 : index
    %66 = vector.load %arg5[%c0_29, %c0_30, %c0_31] : memref<1x8x128xf32, #tpu.memory_space<vmem>>, vector<1x8x128xf32>
    %67 = vector.shape_cast %66 : vector<1x8x128xf32> to vector<8x128xf32>
    %68 = vector.shape_cast %65 : vector<8x128xf32> to vector<1x8x128xf32>
    tpu.vector_store %arg5[%c0_29, %c0_30, %c0_31], %68 {strides = array<i32>} : memref<1x8x128xf32, #tpu.memory_space<vmem>>, vector<1x8x128xf32>,
    return
  }
  func.func @transform_0(%arg0: i32, %arg1: i32, %arg2: i32) -> (i32, i32, i32, i32) {
    %c1_i32 = arith.constant 1 : i32
    %0 = arith.muli %arg0, %c1_i32 : i32
    %1 = arith.addi %0, %arg2 : i32
    %c0_i32 = arith.constant 0 : i32
    %2 = arith.minsi %1, %c0_i32 : i32
    %c0_i32_0 = arith.constant 0 : i32
    %c0_i32_1 = arith.constant 0 : i32
    %c0_i32_2 = arith.constant 0 : i32
    return %arg1, %c0_i32_0, %2, %c0_i32_1 : i32, i32, i32, i32
  }
  func.func @transform_1(%arg0: i32, %arg1: i32, %arg2: i32) -> (i32, i32, i32) {
    %c1_i32 = arith.constant 1 : i32
    %0 = arith.muli %arg0, %c1_i32 : i32
    %1 = arith.addi %0, %arg2 : i32
    %c0_i32 = arith.constant 0 : i32
    %2 = arith.minsi %1, %c0_i32 : i32
    %c0_i32_0 = arith.constant 0 : i32
    %c0_i32_1 = arith.constant 0 : i32
    return %arg1, %2, %c0_i32_0 : i32, i32, i32
  }
  func.func @transform_2(%arg0: i32, %arg1: i32, %arg2: i32) -> (i32, i32, i32) {
    %c0_i32 = arith.constant 0 : i32
    %c0_i32_0 = arith.constant 0 : i32
    %c0_i32_1 = arith.constant 0 : i32
    return %arg0, %c0_i32, %c0_i32_0 : i32, i32, i32
  }
}

</mosaic_0001>

<llo_original>
// kernel: tpu_custom_call.1
$region0: #{tpu_custom_call.1}
  #allocation0 [shape = 'u32[]', space=smem, size = 0x4, offset = 0x4, fixed_abs, tag = 'smem constant byte address 0x4 - core index']
  #allocation1 [shape = 'u32[144,128]{1,0:T(1,128)}', space=vmem, size = 0x12000, scoped, tag = 'internal scratch']
  %s0 = inlined_call_operand.hbm [shape: f32[2,4,32,128], index: 0, kind: input, shape index: {}]
  %s1 = inlined_call_operand.hbm [shape: s32[2,32,128], index: 1, kind: input, shape index: {}]
  %s2 = inlined_call_operand.hbm [shape: f32[1,8,128], index: 2, kind: output, shape index: {}]
  %s3 = sld [smem:[#allocation0]]
  $region53: #{tpu_custom_call.1} parent=0
    _
  %s5 = ssub.s32 1, %s3
  %s6 = scalar_select 0, %s5, %s3
  $region1: #{tpu_custom_call.1} parent=0
    #allocation2 [shape = 'u8[131072]{0}', space=vmem, size = 0x20000, scoped, tag = 'input window, operand 0']
    #allocation3 [shape = 's32[2]{0}', space=sflag, size = 0x8, scoped, tag = 'scoped memory for tpu_custom_call.1']
    #allocation4 [shape = 's32[2]{0}', space=sflag, size = 0x8, scoped, tag = 'scoped memory for tpu_custom_call.1']
    #allocation5 [shape = 'u8[32768]{0}', space=vmem, size = 0x8000, scoped, tag = 'input window, operand 1']
    #allocation6 [shape = 's32[2]{0}', space=sflag, size = 0x8, scoped, tag = 'scoped memory for tpu_custom_call.1']
    #allocation7 [shape = 'u8[4096]{0}', space=vmem, size = 0x1000, scoped, tag = 'output window, operand 0, single buffered']
    %7 = vsyncpa [#allocation3], 0
    %s8 = scalar_lea.sflag [#allocation3], 1
    %9 = vsyncpa %s8, 0
    %10 = vsyncpa [#allocation6], 0
    %s11 = scalar_lea.sflag [#allocation6], 1
    %12 = vsyncpa %s11, 0
    %13 = vsyncpa [#allocation4], 0
    loop: start=0, step=1, limit=4
    $region2: #{tpu_custom_call.1} parent=1 // loop_pre_header
      _
    $region3: #{tpu_custom_call.1} parent=1 // loop_header
      %s15 = sphi 0, %s19
      %p16 = scmp.ge.s32.totalorder %s15, 4
      %s22 = sphi 0, %s41
      %s23 = sphi 0, %s37
      %s24 = sphi 0, %s33
      %s25 = sphi 0, %s22
      %s26 = sphi 0, %s23
      %s27 = sphi 0, %s24
      %s28 = sphi 0, %s25
      %s29 = sphi 0, %s26
      %s30 = sphi 0, %s27
      %s52 = sphi 0, %s54
      %s55 = sphi 0, %s52
      %s56 = sphi 0, %s55
      %s72 = sphi 0, %s56
      %s86 = sphi 0, %s88
      %s89 = sphi 0, %s86
      %s90 = sphi 0, %s89
      %s106 = sphi 0, %s90
      %s112 = sphi 0, %s114
      %s115 = sphi 0, %s112
      %s116 = sphi 0, %s115
      %s132 = sphi 0, %s116
    $region4: #{tpu_custom_call.1} parent=1 // loop_header_branch
      %18 = sbr.rel (%p16) target = $region8
    $region5: #{tpu_custom_call.1} parent=1 // loop_body
      %s20 = ssub.s32 %s15, 1
      %s21 = ssub.s32 %s15, 2
      %s31 = sadd.s32 1, %s24
      %p32 = scmp.ge.s32.totalorder %s31, 1
      %s33 = scalar_select %p32, 0, %s31
      %s34 = sadd.s32 1, %s23
      %s35 = scalar_select %p32, %s34, %s23
      %p36 = scmp.ge.s32.totalorder %s35, 2
      %s37 = scalar_select %p36, 0, %s35
      %s38 = sadd.s32 1, %s22
      %s39 = scalar_select %p36, %s38, %s22
      %p40 = scmp.ge.s32.totalorder %s39, 1
      %s41 = scalar_select %p40, 0, %s39
      %s42 = sadd.s32 %s22, %s24
      %p43 = scmp.lt.s32.totalorder %s42, 0
      %s44 = scalar_select %p43, %s42, 0
      %s45 = sadd.s32 %s41, %s33
      %p46 = scmp.lt.s32.totalorder %s45, 0
      %s47 = scalar_select %p46, %s45, 0
      %s48 = ssub.s32 %s23, %s37
      %s49 = ssub.s32 %s44, %s47
      %s50 = sor.u32 %s48, %s49
      %p51 = scmp.eq.s32.totalorder %s50, 0
      %s53 = sadd.s32 %s52, 1
      %s54 = scalar_select %p51, %s52, %s53
      %p57 = pneg %p51
      %p58 = scmp.eq.s32.totalorder %s15, 1
      %p59 = por %p57, %p58
      %p60 = scmp.ne.s32.totalorder %s52, %s55
      %p61 = scmp.eq.s32.totalorder %s15, 0
      %p62 = por %p60, %p61
      %p63 = scmp.ne.s32.totalorder %s52, %s55
      %p64 = scmp.eq.s32.totalorder %s20, 1
      %p65 = por %p63, %p64
      %p66 = scmp.ne.s32.totalorder %s55, %s56
      %p67 = scmp.eq.s32.totalorder %s20, 0
      %p68 = por %p66, %p67
      %p69 = scmp.ne.s32.totalorder %s55, %s56
      %p70 = scmp.eq.s32.totalorder %s21, 1
      %p71 = por %p69, %p70
      %p73 = scmp.ne.s32.totalorder %s56, %s72
      %p74 = scmp.eq.s32.totalorder %s21, 0
      %p75 = por %p73, %p74
      %s76 = sadd.s32 %s22, %s24
      %p77 = scmp.lt.s32.totalorder %s76, 0
      %s78 = scalar_select %p77, %s76, 0
      %s79 = sadd.s32 %s41, %s33
      %p80 = scmp.lt.s32.totalorder %s79, 0
      %s81 = scalar_select %p80, %s79, 0
      %s82 = ssub.s32 %s23, %s37
      %s83 = ssub.s32 %s78, %s81
      %s84 = sor.u32 %s82, %s83
      %p85 = scmp.eq.s32.totalorder %s84, 0
      %s87 = sadd.s32 %s86, 1
      %s88 = scalar_select %p85, %s86, %s87
      %p91 = pneg %p85
      %p92 = scmp.eq.s32.totalorder %s15, 1
      %p93 = por %p91, %p92
      %p94 = scmp.ne.s32.totalorder %s86, %s89
      %p95 = scmp.eq.s32.totalorder %s15, 0
      %p96 = por %p94, %p95
      %p97 = scmp.ne.s32.totalorder %s86, %s89
      %p98 = scmp.eq.s32.totalorder %s20, 1
      %p99 = por %p97, %p98
      %p100 = scmp.ne.s32.totalorder %s89, %s90
      %p101 = scmp.eq.s32.totalorder %s20, 0
      %p102 = por %p100, %p101
      %p103 = scmp.ne.s32.totalorder %s89, %s90
      %p104 = scmp.eq.s32.totalorder %s21, 1
      %p105 = por %p103, %p104
      %p107 = scmp.ne.s32.totalorder %s90, %s106
      %p108 = scmp.eq.s32.totalorder %s21, 0
      %p109 = por %p107, %p108
      %s110 = ssub.s32 %s22, %s41
      %p111 = scmp.eq.s32.totalorder %s110, 0
      %s113 = sadd.s32 %s112, 1
      %s114 = scalar_select %p111, %s112, %s113
      %p117 = pneg %p111
      %p118 = scmp.eq.s32.totalorder %s15, 1
      %p119 = por %p117, %p118
      %p120 = scmp.ne.s32.totalorder %s112, %s115
      %p121 = scmp.eq.s32.totalorder %s15, 0
      %p122 = por %p120, %p121
      %p123 = scmp.ne.s32.totalorder %s112, %s115
      %p124 = scmp.eq.s32.totalorder %s20, 1
      %p125 = por %p123, %p124
      %p126 = scmp.ne.s32.totalorder %s115, %s116
      %p127 = scmp.eq.s32.totalorder %s20, 0
      %p128 = por %p126, %p127
      %p129 = scmp.ne.s32.totalorder %s115, %s116
      %p130 = scmp.eq.s32.totalorder %s21, 1
      %p131 = por %p129, %p130
      %p133 = scmp.ne.s32.totalorder %s116, %s132
      %p134 = scmp.eq.s32.totalorder %s21, 0
      %p135 = por %p133, %p134
      %p136 = scmp.le.s32.totalorder 1, %s15
      %p137 = scmp.lt.s32.totalorder %s15, 3
      %p138 = pnand %p136, %p137
      %p139 = pneg %p138
      // Predicated region
      $region9: #{tpu_custom_call.1} parent=5 // pred_check
        _
      $region10: #{tpu_custom_call.1} parent=5 // pred_check_branch
        %141 = sbr.rel (%p138) target = $region12
      $region11: #{tpu_custom_call.1} parent=5 // pred_region
        %s142 = ssub.s32 %s15, 1
      $region12: #{tpu_custom_call.1} parent=5 // pred_fallthru
        _
      %p143 = scmp.lt.s32.totalorder %s15, 2
      // Predicated region
      $region13: #{tpu_custom_call.1} parent=5 // pred_check
        %p144 = pneg %p143
      $region14: #{tpu_custom_call.1} parent=5 // pred_check_branch
        %146 = sbr.rel (%p144) target = $region16
      $region15: #{tpu_custom_call.1} parent=5 // pred_region
        // Predicated region
        $region17: #{tpu_custom_call.1} parent=15 // pred_check
          %p147 = pneg %p62
        $region18: #{tpu_custom_call.1} parent=15 // pred_check_branch
          %149 = sbr.rel (%p147) target = $region20
        $region19: #{tpu_custom_call.1} parent=15 // pred_region
          %s150 = sand.u32 %s52, 1
          %s151 = scalar_lea.sflag [#allocation3], %s150
          %s152 = sand.u32 %s52, 1
          %s153 = smul.addr %s152, 128
          %s154 = scalar_lea.vmem [#allocation2], %s153
          %s155 = sadd.s32 %s22, %s24
          %p156 = scmp.lt.s32.totalorder %s155, 0
          %s157 = scalar_select %p156, %s155, 0
          %s158 = smul.u32 4, %s157
          %s160 = ssub.s32 2048, 2048
          %161 = vsyncadd %s151, %s160
          %s162 = smul.addr %s23, 16
          %s163 = sadd.s32 %s158, %s162
          %s164 = smul.addr %s163, 128
          %s165 = scalar_lea.hbm %s0, %s164
          %s166 = sshll.u32 %s154, 4
          %s167 = int_to_ptr.vmem [resolvable:$true] %s166
          %172 = dma.hbm_to_vmem [thread:$0]  %s165, 2048, %s167, %s151, 128, 128, 8
        $region20: #{tpu_custom_call.1} parent=15 // pred_fallthru
          _
        // Predicated region
        $region21: #{tpu_custom_call.1} parent=15 // pred_check
          %p173 = pneg %p96
        $region22: #{tpu_custom_call.1} parent=15 // pred_check_branch
          %175 = sbr.rel (%p173) target = $region24
        $region23: #{tpu_custom_call.1} parent=15 // pred_region
          %s176 = sand.u32 %s86, 1
          %s177 = scalar_lea.sflag [#allocation6], %s176
          %s178 = sand.u32 %s86, 1
          %s179 = smul.addr %s178, 32
          %s180 = scalar_lea.vmem [#allocation5], %s179
          %s181 = sadd.s32 %s22, %s24
          %p182 = scmp.lt.s32.totalorder %s181, 0
          %s183 = scalar_select %p182, %s181, 0
          %s184 = smul.u32 4, %s183
          %s186 = ssub.s32 512, 512
          %187 = vsyncadd %s177, %s186
          %s188 = smul.addr %s23, 4
          %s189 = sadd.s32 %s184, %s188
          %s190 = smul.addr %s189, 128
          %s191 = scalar_lea.hbm %s1, %s190
          %s192 = sshll.u32 %s180, 4
          %s193 = int_to_ptr.vmem [resolvable:$true] %s192
          %198 = dma.hbm_to_vmem [thread:$0]  %s191, 512, %s193, %s177, 128, 128, 8
        $region24: #{tpu_custom_call.1} parent=15 // pred_fallthru
          _
      $region16: #{tpu_custom_call.1} parent=5 // pred_fallthru
        _
      %p199 = scmp.le.s32.totalorder 1, %s15
      %p200 = scmp.lt.s32.totalorder %s15, 3
      %p201 = pnand %p199, %p200
      %p202 = pneg %p201
      // Predicated region
      $region25: #{tpu_custom_call.1} parent=5 // pred_check
        _
      $region26: #{tpu_custom_call.1} parent=5 // pred_check_branch
        %204 = sbr.rel (%p201) target = $region28
      $region27: #{tpu_custom_call.1} parent=5 // pred_region
        %s205 = ssub.s32 %s15, 1
        %s206 = sand.u32 %s55, 1
        %s207 = scalar_lea.sflag [#allocation3], %s206
        %s208 = sand.u32 %s55, 1
        %s209 = smul.addr %s208, 128
        %s210 = scalar_lea.vmem [#allocation2], %s209
        // Predicated region
        $region29: #{tpu_custom_call.1} parent=27 // pred_check
          %p211 = pneg %p68
        $region30: #{tpu_custom_call.1} parent=27 // pred_check_branch
          %213 = sbr.rel (%p211) target = $region32
        $region31: #{tpu_custom_call.1} parent=27 // pred_region
          %214 = dma.done %s207, 2048
        $region32: #{tpu_custom_call.1} parent=27 // pred_fallthru
          _
        %s215 = sand.u32 %s89, 1
        %s216 = scalar_lea.sflag [#allocation6], %s215
        %s217 = sand.u32 %s89, 1
        %s218 = smul.addr %s217, 32
        %s219 = scalar_lea.vmem [#allocation5], %s218
        // Predicated region
        $region33: #{tpu_custom_call.1} parent=27 // pred_check
          %p220 = pneg %p102
        $region34: #{tpu_custom_call.1} parent=27 // pred_check_branch
          %222 = sbr.rel (%p220) target = $region36
        $region35: #{tpu_custom_call.1} parent=27 // pred_region
          %223 = dma.done %s216, 512
        $region36: #{tpu_custom_call.1} parent=27 // pred_fallthru
          _
        %s224 = sand.u32 %s55, 1
        %s225 = scalar_lea.sflag [#allocation3], %s224
        %s226 = sand.u32 %s55, 1
        %s227 = smul.addr %s226, 128
        %s228 = scalar_lea.vmem [#allocation2], %s227
        %p229 = pneg %p68
        %p230 = pneg %p65
        %s231 = sand.u32 %s89, 1
        %s232 = scalar_lea.sflag [#allocation6], %s231
        %s233 = sand.u32 %s89, 1
        %s234 = smul.addr %s233, 32
        %s235 = scalar_lea.vmem [#allocation5], %s234
        %p236 = pneg %p102
        %p237 = pneg %p99
        %p238 = pneg %p128
        %p239 = pneg %p125
        %s240 = sadd.s32 %s25, %s27
        %p241 = scmp.lt.s32.totalorder %s240, 0
        %s242 = scalar_select %p241, %s240, 0
        %s243 = smul.u32 4, %s242
        %s244 = sadd.s32 %s25, %s27
        %p245 = scmp.lt.s32.totalorder %s244, 0
        %s246 = scalar_select %p245, %s244, 0
        %s247 = smul.u32 4, %s246
        %p248 = scmp.eq.s32.totalorder %s26, 0
        %p249 = scmp.eq.s32.totalorder %s27, 0
        %p250 = pnand %p248, %p249
        %p251 = pneg %p250
        // Predicated region
        $region37: #{tpu_custom_call.1} parent=27 // pred_check
          _
        $region38: #{tpu_custom_call.1} parent=27 // pred_check_branch
          %253 = sbr.rel (%p250) target = $region40
        $region39: #{tpu_custom_call.1} parent=27 // pred_region
          %254 = vst [vmem:[#allocation7] sm:$0xff] 0.0
        $region40: #{tpu_custom_call.1} parent=27 // pred_fallthru
          _
        %v255 = vld [vmem:[%s219] sm:$0xff]
        %v256 = vld [vmem:[%s219 + $0x8] sm:$0xff]
        %v257 = vld [vmem:[%s219 + $0x10] sm:$0xff]
        %v258 = vld [vmem:[%s219 + $0x18] sm:$0xff]
        %v259 = vld [vmem:[%s210] sm:$0xff]
        %v260 = vld [vmem:[%s210 + $0x8] sm:$0xff]
        %v261 = vld [vmem:[%s210 + $0x10] sm:$0xff]
        %v262 = vld [vmem:[%s210 + $0x18] sm:$0xff]
        %s263 = scalar_lea.vmem %s210, 32 [#allocation2]
        %v264 = vld [vmem:[%s263] sm:$0xff]
        %v265 = vld [vmem:[%s263 + $0x8] sm:$0xff]
        %v266 = vld [vmem:[%s263 + $0x10] sm:$0xff]
        %v267 = vld [vmem:[%s263 + $0x18] sm:$0xff]
        %s268 = scalar_lea.vmem %s210, 64 [#allocation2]
        %v269 = vld [vmem:[%s268] sm:$0xff]
        %v270 = vld [vmem:[%s268 + $0x8] sm:$0xff]
        %v271 = vld [vmem:[%s268 + $0x10] sm:$0xff]
        %v272 = vld [vmem:[%s268 + $0x18] sm:$0xff]
        %s273 = scalar_lea.vmem %s210, 96 [#allocation2]
        %v274 = vld [vmem:[%s273] sm:$0xff]
        %v275 = vld [vmem:[%s273 + $0x8] sm:$0xff]
        %v276 = vld [vmem:[%s273 + $0x10] sm:$0xff]
        %v277 = vld [vmem:[%s273 + $0x18] sm:$0xff]
        %v278 = vmax.f32 %v259, %v264
        %v279 = vmax.f32 %v260, %v265
        %v280 = vmax.f32 %v261, %v266
        %v281 = vmax.f32 %v262, %v267
        %v282 = vmax.f32 %v278, %v269
        %v283 = vmax.f32 %v279, %v270
        %v284 = vmax.f32 %v280, %v271
        %v285 = vmax.f32 %v281, %v272
        %v286 = vmax.f32 %v282, %v274
        %v287 = vmax.f32 %v283, %v275
        %v288 = vmax.f32 %v284, %v276
        %v289 = vmax.f32 %v285, %v277
        %v290 = vsub.f32 %v259, %v286
        %v291 = vsub.f32 %v260, %v287
        %v292 = vsub.f32 %v261, %v288
        %v293 = vsub.f32 %v262, %v289
        %v294 = vmul.f32 %v290, 1.442695
        %v295 = vpow.pop %v294
        %v296 = vmul.f32 %v291, 1.442695
        %v297 = vpow.pop %v296
        %v298 = vmul.f32 %v292, 1.442695
        %v299 = vpow.pop %v298
        %v300 = vmul.f32 %v293, 1.442695
        %v301 = vpow.pop %v300
        %vm302 = vcmp.eq.s32.totalorder %v255, 0
        %vm303 = vcmp.eq.s32.totalorder %v256, 0
        %vm304 = vcmp.eq.s32.totalorder %v257, 0
        %vm305 = vcmp.eq.s32.totalorder %v258, 0
        %v306 = vsel %vm302, %v290, 0.0
        %v307 = vsel %vm303, %v291, 0.0
        %v308 = vsel %vm304, %v292, 0.0
        %v309 = vsel %vm305, %v293, 0.0
        %v310 = vsel %vm302, 0.01, 0.0
        %v311 = vsel %vm303, 0.01, 0.0
        %v312 = vsel %vm304, 0.01, 0.0
        %v313 = vsel %vm305, 0.01, 0.0
        %v314 = vsub.f32 %v264, %v286
        %v315 = vsub.f32 %v265, %v287
        %v316 = vsub.f32 %v266, %v288
        %v317 = vsub.f32 %v267, %v289
        %v318 = vmul.f32 %v314, 1.442695
        %v319 = vpow.pop %v318
        %v320 = vmul.f32 %v315, 1.442695
        %v321 = vpow.pop %v320
        %v322 = vmul.f32 %v316, 1.442695
        %v323 = vpow.pop %v322
        %v324 = vmul.f32 %v317, 1.442695
        %v325 = vpow.pop %v324
        %v326 = vadd.f32 %v295, %v319
        %v327 = vadd.f32 %v297, %v321
        %v328 = vadd.f32 %v299, %v323
        %v329 = vadd.f32 %v301, %v325
        %vm330 = vcmp.eq.s32.totalorder %v255, 1
        %vm331 = vcmp.eq.s32.totalorder %v256, 1
        %vm332 = vcmp.eq.s32.totalorder %v257, 1
        %vm333 = vcmp.eq.s32.totalorder %v258, 1
        %v334 = vsel %vm330, %v314, %v306
        %v335 = vsel %vm331, %v315, %v307
        %v336 = vsel %vm332, %v316, %v308
        %v337 = vsel %vm333, %v317, %v309
        %v338 = vsel %vm330, 4.0, %v310
        %v339 = vsel %vm331, 4.0, %v311
        %v340 = vsel %vm332, 4.0, %v312
        %v341 = vsel %vm333, 4.0, %v313
        %v342 = vsub.f32 %v269, %v286
        %v343 = vsub.f32 %v270, %v287
        %v344 = vsub.f32 %v271, %v288
        %v345 = vsub.f32 %v272, %v289
        %v346 = vmul.f32 %v342, 1.442695
        %v347 = vpow.pop %v346
        %v348 = vmul.f32 %v343, 1.442695
        %v349 = vpow.pop %v348
        %v350 = vmul.f32 %v344, 1.442695
        %v351 = vpow.pop %v350
        %v352 = vmul.f32 %v345, 1.442695
        %v353 = vpow.pop %v352
        %v354 = vadd.f32 %v326, %v347
        %v355 = vadd.f32 %v327, %v349
        %v356 = vadd.f32 %v328, %v351
        %v357 = vadd.f32 %v329, %v353
        %vm358 = vcmp.eq.s32.totalorder %v255, 2
        %vm359 = vcmp.eq.s32.totalorder %v256, 2
        %vm360 = vcmp.eq.s32.totalorder %v257, 2
        %vm361 = vcmp.eq.s32.totalorder %v258, 2
        %v362 = vsel %vm358, %v342, %v334
        %v363 = vsel %vm359, %v343, %v335
        %v364 = vsel %vm360, %v344, %v336
        %v365 = vsel %vm361, %v345, %v337
        %v366 = vsel %vm358, 1.8, %v338
        %v367 = vsel %vm359, 1.8, %v339
        %v368 = vsel %vm360, 1.8, %v340
        %v369 = vsel %vm361, 1.8, %v341
        %v370 = vsub.f32 %v274, %v286
        %v371 = vsub.f32 %v275, %v287
        %v372 = vsub.f32 %v276, %v288
        %v373 = vsub.f32 %v277, %v289
        %v374 = vmul.f32 %v370, 1.442695
        %v375 = vpow.pop %v374
        %v376 = vmul.f32 %v371, 1.442695
        %v377 = vpow.pop %v376
        %v378 = vmul.f32 %v372, 1.442695
        %v379 = vpow.pop %v378
        %v380 = vmul.f32 %v373, 1.442695
        %v381 = vpow.pop %v380
        %v382 = vadd.f32 %v354, %v375
        %v383 = vadd.f32 %v355, %v377
        %v384 = vadd.f32 %v356, %v379
        %v385 = vadd.f32 %v357, %v381
        %vm386 = vcmp.eq.s32.totalorder %v255, 3
        %vm387 = vcmp.eq.s32.totalorder %v256, 3
        %vm388 = vcmp.eq.s32.totalorder %v257, 3
        %vm389 = vcmp.eq.s32.totalorder %v258, 3
        %v390 = vsel %vm386, %v370, %v362
        %v391 = vsel %vm387, %v371, %v363
        %v392 = vsel %vm388, %v372, %v364
        %v393 = vsel %vm389, %v373, %v365
        %v394 = vsel %vm386, 6.0, %v366
        %v395 = vsel %vm387, 6.0, %v367
        %v396 = vsel %vm388, 6.0, %v368
        %v397 = vsel %vm389, 6.0, %v369
        %v398 = vlog2.pop %v382
        %v399 = vmul.f32 %v398, 0.6931472
        %v400 = vlog2.pop %v383
        %v401 = vmul.f32 %v400, 0.6931472
        %v402 = vlog2.pop %v384
        %v403 = vmul.f32 %v402, 0.6931472
        %v404 = vlog2.pop %v385
        %v405 = vmul.f32 %v404, 0.6931472
        %v406 = vsub.f32 %v390, %v399
        %v407 = vsub.f32 %v391, %v401
        %v408 = vsub.f32 %v392, %v403
        %v409 = vsub.f32 %v393, %v405
        %v410 = vmul.f32 %v394, %v406
        %v411 = vmul.f32 %v395, %v407
        %v412 = vmul.f32 %v396, %v408
        %v413 = vmul.f32 %v397, %v409
        %v414 = vmul.f32 %v410, 1.442695
        %v415 = vpow.pop %v414
        %v416 = vmul.f32 %v411, 1.442695
        %v417 = vpow.pop %v416
        %v418 = vmul.f32 %v412, 1.442695
        %v419 = vpow.pop %v418
        %v420 = vmul.f32 %v413, 1.442695
        %v421 = vpow.pop %v420
        %v422 = vsub.f32 1.0, %v415
        %v423 = vsub.f32 1.0, %v417
        %v424 = vsub.f32 1.0, %v419
        %v425 = vsub.f32 1.0, %v421
        %v426 = vmul.f32 %v422, %v422
        %v427 = vmul.f32 %v423, %v423
        %v428 = vmul.f32 %v424, %v424
        %v429 = vmul.f32 %v425, %v425
        %v430 = vmul.f32 %v426, %v410
        %v431 = vmul.f32 %v427, %v411
        %v432 = vmul.f32 %v428, %v412
        %v433 = vmul.f32 %v429, %v413
        %v434 = vsub.f32 0.0, %v430
        %v435 = vsub.f32 0.0, %v431
        %v436 = vsub.f32 0.0, %v432
        %v437 = vsub.f32 0.0, %v433
        %v438 = vld [vmem:[#allocation7] sm:$0xff]
        %v439 = vadd.f32 %v434, %v435
        %v440 = vadd.f32 %v439, %v436
        %v441 = vadd.f32 %v440, %v437
        %v442 = vadd.f32 %v438, %v441
        %443 = vst [vmem:[#allocation7] sm:$0xff] %v442
        // Predicated region
        $region41: #{tpu_custom_call.1} parent=27 // pred_check
          %p444 = pneg %p125
        $region42: #{tpu_custom_call.1} parent=27 // pred_check_branch
          %446 = sbr.rel (%p444) target = $region44
        $region43: #{tpu_custom_call.1} parent=27 // pred_region
          %s448 = ssub.s32 128, 128
          %449 = vsyncadd [#allocation4], %s448
          %s450 = smul.addr %s25, 128
          %s451 = scalar_lea.hbm %s2, %s450
          %s453 = sshll.u32 [#allocation7], 4
          %s454 = int_to_ptr.vmem [resolvable:$true] %s453
          %456 = dma.vmem_to_hbm [thread:$0]  %s454, 128, %s451, [#allocation4]
        $region44: #{tpu_custom_call.1} parent=27 // pred_fallthru
          _
        // Predicated region
        $region45: #{tpu_custom_call.1} parent=27 // pred_check
          %p457 = pneg %p125
        $region46: #{tpu_custom_call.1} parent=27 // pred_check_branch
          %459 = sbr.rel (%p457) target = $region48
        $region47: #{tpu_custom_call.1} parent=27 // pred_region
          %460 = dma.done [#allocation4], 128
        $region48: #{tpu_custom_call.1} parent=27 // pred_fallthru
          _
      $region28: #{tpu_custom_call.1} parent=5 // pred_fallthru
        _
      %p461 = scmp.le.s32.totalorder 2, %s15
      // Predicated region
      $region49: #{tpu_custom_call.1} parent=5 // pred_check
        %p462 = pneg %p461
      $region50: #{tpu_custom_call.1} parent=5 // pred_check_branch
        %464 = sbr.rel (%p462) target = $region52
      $region51: #{tpu_custom_call.1} parent=5 // pred_region
        %s465 = ssub.s32 %s15, 2
      $region52: #{tpu_custom_call.1} parent=5 // pred_fallthru
        _
    $region6: #{tpu_custom_call.1} parent=1 // loop_footer
      %s19 = sadd.s32 1, %s15
    $region7: #{tpu_custom_call.1} parent=1 // loop_footer_branch
      %14 = sbr.rel target = $region3
    $region8: #{tpu_custom_call.1} parent=1 // loop_exit
      _
    %466 = vsyncpa [#allocation3], 1
    %s467 = scalar_lea.sflag [#allocation3], 1
    %468 = vsyncpa %s467, 1
    %469 = vsyncpa [#allocation6], 1
    %s470 = scalar_lea.sflag [#allocation6], 1
    %471 = vsyncpa %s470, 1
    %472 = vsyncpa [#allocation4], 1
    %s473 = scalar_lea.sflag [#allocation4], 1
    %474 = vsyncpa %s473, 1

</llo_original>
